<compile_context>
chip_gen: v7x
topology: tpu7x:2x2x1
jax: 0.10.0
libtpu: 0.0.40
codegen_flags: <defaults>
</compile_context>

<pallas_src>
import jax
import jax.numpy as jnp
from jax.experimental import pallas as pl
from jax.experimental.pallas import tpu as pltpu


def _emd_kernel(pe_ref, pt_ref, emd_ref):
    """One batch tile: per-sample EMD = sqrt(mean_c((cumsum_c(pe - pt))^2))."""
    C = pe_ref.shape[-1]
    diff = pe_ref[...] - pt_ref[...]                          # (TILE_N, C), native dtype

    # bf16 inputs -> bf16 MXU operands (f32 accumulation); otherwise exact f32 matmul.
    if diff.dtype == jnp.bfloat16:
        mm_dtype = jnp.bfloat16
    else:
        mm_dtype = jnp.float32
        diff = diff.astype(jnp.float32)

    # Upper-triangular ones generated in-kernel: tri[k, c] = 1 iff k <= c,
    # so diff @ tri == cumsum(diff, axis=1). Cheap VPU filler, zero HBM traffic.
    row = jax.lax.broadcasted_iota(jnp.int32, (C, C), 0)
    col = jax.lax.broadcasted_iota(jnp.int32, (C, C), 1)
    tri = (row <= col).astype(mm_dtype)

    cdf_diff = jnp.dot(diff.astype(mm_dtype), tri,
                       preferred_element_type=jnp.float32)    # (TILE_N, C), f32 acc
    sq = cdf_diff * cdf_diff                                  # |cdf_diff|^2, f32 VPU
    row_mean = jnp.mean(sq, axis=1, keepdims=True)            # (TILE_N, 1)
    emd_ref[...] = jnp.sqrt(row_mean).astype(emd_ref.dtype)   # per-sample EMD


def _choose_tile_n(N: int, C: int, itemsize: int) -> int:
    # Budget ~8 MiB for the double-buffered input tiles (2 inputs x 2 pipeline bufs),
    # which stays well inside v7x's 64 MiB VMEM even with f32 intermediates.
    budget = 8 * 1024 * 1024
    per_row = 2 * 2 * C * itemsize
    tile = budget // max(per_row, 1)
    tile = max(128, min(1024, (tile // 128) * 128))   # multiple of 128, 128..1024 rows
    if N <= tile:
        return N                                      # single tile == full batch dim
    return tile


def emd_loss(p_estimate: jax.Array, p_target: jax.Array) -> jax.Array:
    assert p_estimate.shape == p_target.shape
    N, C = p_estimate.shape
    itemsize = jnp.dtype(p_estimate.dtype).itemsize

    tile_n = _choose_tile_n(N, C, itemsize)
    num_tiles = pl.cdiv(N, tile_n)

    # Explicit VMEM budget: double-buffered inputs + tri + f32 intermediates + slack.
    vmem_need = (2 * 2 * tile_n * C * itemsize) + (C * C * 4) + (3 * tile_n * C * 4)
    vmem_limit = int(min(max(vmem_need + (4 << 20), 16 << 20), 48 << 20))

    per_sample = pl.pallas_call(
        _emd_kernel,
        out_shape=jax.ShapeDtypeStruct((N, 1), jnp.float32),
        grid=(num_tiles,),
        in_specs=[
            pl.BlockSpec((tile_n, C), lambda i: (i, 0)),
            pl.BlockSpec((tile_n, C), lambda i: (i, 0)),
        ],
        out_specs=pl.BlockSpec((tile_n, 1), lambda i: (i, 0)),
        compiler_params=pltpu.CompilerParams(
            dimension_semantics=("parallel",),
            vmem_limit_bytes=vmem_limit,
        ),
        cost_estimate=pl.CostEstimate(
            flops=2 * N * C * C + 4 * N * C,
            transcendentals=N,
            bytes_accessed=2 * N * C * itemsize + N * 4,
        ),
    )(p_estimate, p_target)

    # Tiny final reduction over N per-sample EMDs done in JAX (keeps the grid axis
    # parallel / free of a serialized cross-tile accumulator).
    return jnp.mean(per_sample)


def emd_loss_ref(p_estimate, p_target):
    # Pure-JAX reference mirroring the PyTorch forward exactly.
    cdf_target = jnp.cumsum(p_target, axis=1)
    cdf_estimate = jnp.cumsum(p_estimate, axis=1)
    cdf_diff = cdf_estimate - cdf_target
    a = jnp.abs(cdf_diff) ** 2
    b = jnp.mean(a, axis=1)
    samplewise_emd = jnp.sqrt(b)
    return jnp.mean(samplewise_emd)


if __name__ == "__main__":
    key = jax.random.PRNGKey(0)
    k1, k2 = jax.random.split(key)
    N, C = 8, 16  # batch of 8 samples, 16-bin distributions
    p_estimate = jax.nn.softmax(jax.random.normal(k1, (N, C), jnp.float32), axis=1)
    p_target = jax.nn.softmax(jax.random.normal(k2, (N, C), jnp.float32), axis=1)

    loss = emd_loss(p_estimate, p_target)
    jax.block_until_ready(loss)

    ref = emd_loss_ref(p_estimate, p_target)
    assert jnp.allclose(loss, ref, atol=1e-5, rtol=1e-5), (loss, ref)
    print("KERNEL_OK")
</pallas_src>

<mosaic_0001>
module attributes {stable_mosaic.version = 11 : i64} {
  func.func @_emd_kernel(%arg0: i32, %arg1: memref<8x16xf32, #tpu.memory_space<vmem>>, %arg2: memref<8x16xf32, #tpu.memory_space<vmem>>, %arg3: memref<8x1xf32, #tpu.memory_space<vmem>>) attributes {dimension_semantics = [#tpu.dimension_semantics<parallel>], iteration_bounds = array<i64: 1>, scalar_prefetch = 0 : i64, scratch_operands = 0 : i64, tpu.core_type = #tpu.core_type<tc>, window_params = [{transform_indices = @transform_0, window_bounds = array<i64: 8, 16>}, {transform_indices = @transform_1, window_bounds = array<i64: 8, 16>}, {transform_indices = @transform_2, window_bounds = array<i64: 8, 1>}]} {
    %c0 = arith.constant 0 : index
    %c0_0 = arith.constant 0 : index
    %0 = vector.load %arg1[%c0, %c0_0] : memref<8x16xf32, #tpu.memory_space<vmem>>, vector<8x16xf32>
    %c0_1 = arith.constant 0 : index
    %c0_2 = arith.constant 0 : index
    %1 = vector.load %arg2[%c0_1, %c0_2] : memref<8x16xf32, #tpu.memory_space<vmem>>, vector<8x16xf32>
    %2 = arith.subf %0, %1 : vector<8x16xf32>
    %3 = tpu.iota {dimensions = array<i32: 0>} : vector<16x16xi32>
    %4 = tpu.iota {dimensions = array<i32: 1>} : vector<16x16xi32>
    %5 = arith.cmpi sle, %3, %4 : vector<16x16xi32>
    %6 = arith.extui %5 : vector<16x16xi1> to vector<16x16xi32>
    %7 = arith.sitofp %6 : vector<16x16xi32> to vector<16x16xf32>
    %cst = arith.constant dense<0.000000e+00> : vector<8x16xf32>
    %8 = tpu.matmul %2, %7, %cst {dimension_numbers = #tpu.dot_dimension_numbers<[1], [0], [0], [1], [0, 0, 1, 1], [], []>} : vector<8x16xf32>, vector<16x16xf32>, vector<8x16xf32> -> vector<8x16xf32>
    %9 = arith.mulf %8, %8 : vector<8x16xf32>
    %cst_3 = arith.constant dense<0.000000e+00> : vector<8xf32>
    %10 = vector.multi_reduction <add>, %9, %cst_3 [1] : vector<8x16xf32> to vector<8xf32>
    %11 = vector.shape_cast %10 : vector<8xf32> to vector<8x1xf32>
    %cst_4 = arith.constant 1.600000e+01 : f32
    %12 = vector.broadcast %cst_4 : f32 to vector<8x1xf32>
    %13 = arith.divf %11, %12 : vector<8x1xf32>
    %14 = math.sqrt %13 : vector<8x1xf32>
    %c0_5 = arith.constant 0 : index
    %c0_6 = arith.constant 0 : index
    %15 = vector.load %arg3[%c0_5, %c0_6] : memref<8x1xf32, #tpu.memory_space<vmem>>, vector<8x1xf32>
    tpu.vector_store %arg3[%c0_5, %c0_6], %14 {strides = array<i32>} : memref<8x1xf32, #tpu.memory_space<vmem>>, vector<8x1xf32>,
    return
  }
  func.func @transform_0(%arg0: i32) -> (i32, i32) {
    %c0_i32 = arith.constant 0 : i32
    %c0_i32_0 = arith.constant 0 : i32
    return %arg0, %c0_i32 : i32, i32
  }
  func.func @transform_1(%arg0: i32) -> (i32, i32) {
    %c0_i32 = arith.constant 0 : i32
    %c0_i32_0 = arith.constant 0 : i32
    return %arg0, %c0_i32 : i32, i32
  }
  func.func @transform_2(%arg0: i32) -> (i32, i32) {
    %c0_i32 = arith.constant 0 : i32
    %c0_i32_0 = arith.constant 0 : i32
    return %arg0, %c0_i32 : i32, i32
  }
}

</mosaic_0001>

<llo_original>
// kernel: tpu_custom_call.1
$region0: #{tpu_custom_call.1}
  #allocation0 [shape = 'u32[]', space=smem, size = 0x4, offset = 0x4, fixed_abs, tag = 'smem constant byte address 0x4 - core index']
  #allocation1 [shape = 'u32[144,128]{1,0:T(1,128)}', space=vmem, size = 0x12000, scoped, tag = 'internal scratch']
  %s0 = inlined_call_operand.hbm [shape: f32[8,16], index: 0, kind: input, shape index: {}]
  %s1 = inlined_call_operand.hbm [shape: f32[8,16], index: 1, kind: input, shape index: {}]
  %s2 = inlined_call_operand.vmem [shape: f32[8,1], index: 2, kind: output, shape index: {}]
  %s3 = sld [smem:[#allocation0]]
  $region26: #{tpu_custom_call.1} parent=0
    _
  %s5 = ssub.s32 1, %s3
  %s6 = scalar_select 0, %s5, %s3
  $region1: #{tpu_custom_call.1} parent=0
    #allocation2 [shape = 'u8[4096]{0}', space=vmem, size = 0x1000, scoped, tag = 'input window, operand 0, single buffered']
    #allocation3 [shape = 's32[1]{0}', space=sflag, size = 0x4, scoped, tag = 'scoped memory for tpu_custom_call.1']
    #allocation4 [shape = 'u8[4096]{0}', space=vmem, size = 0x1000, scoped, tag = 'input window, operand 1, single buffered']
    #allocation5 [shape = 's32[1]{0}', space=sflag, size = 0x4, scoped, tag = 'scoped memory for tpu_custom_call.1']
    %7 = vsyncpa [#allocation3], 0
    %8 = vsyncpa [#allocation5], 0
    // Predicated region
    $region2: #{tpu_custom_call.1} parent=1 // pred_check
      _
    $region3: #{tpu_custom_call.1} parent=1 // pred_check_branch
      %10 = sbr.rel (0) target = $region5
    $region4: #{tpu_custom_call.1} parent=1 // pred_region
      %s12 = ssub.s32 128, 128
      %13 = vsyncadd [#allocation3], %s12
      %s15 = sshll.u32 [#allocation2], 4
      %s16 = int_to_ptr.vmem [resolvable:$true] %s15
      %18 = dma.hbm_to_vmem [thread:$0]  %s0, 128, %s16, [#allocation3]
    $region5: #{tpu_custom_call.1} parent=1 // pred_fallthru
      _
    // Predicated region
    $region6: #{tpu_custom_call.1} parent=1 // pred_check
      _
    $region7: #{tpu_custom_call.1} parent=1 // pred_check_branch
      %20 = sbr.rel (0) target = $region9
    $region8: #{tpu_custom_call.1} parent=1 // pred_region
      %s22 = ssub.s32 128, 128
      %23 = vsyncadd [#allocation5], %s22
      %s25 = sshll.u32 [#allocation4], 4
      %s26 = int_to_ptr.vmem [resolvable:$true] %s25
      %28 = dma.hbm_to_vmem [thread:$0]  %s1, 128, %s26, [#allocation5]
    $region9: #{tpu_custom_call.1} parent=1 // pred_fallthru
      _
    // Predicated region
    $region10: #{tpu_custom_call.1} parent=1 // pred_check
      _
    $region11: #{tpu_custom_call.1} parent=1 // pred_check_branch
      %30 = sbr.rel (0) target = $region13
    $region12: #{tpu_custom_call.1} parent=1 // pred_region
      %31 = dma.done [#allocation3], 128
    $region13: #{tpu_custom_call.1} parent=1 // pred_fallthru
      _
    // Predicated region
    $region14: #{tpu_custom_call.1} parent=1 // pred_check
      _
    $region15: #{tpu_custom_call.1} parent=1 // pred_check_branch
      %33 = sbr.rel (0) target = $region17
    $region16: #{tpu_custom_call.1} parent=1 // pred_region
      %34 = dma.done [#allocation5], 128
    $region17: #{tpu_custom_call.1} parent=1 // pred_fallthru
      _
    %v35 = vld [vmem:[#allocation2] sm:$0xff]
    %v36 = vld [vmem:[#allocation4] sm:$0xff]
    %v37 = vsub.f32 %v35, %v36
    %v38 = vlaneseq
    %v39 = vshrl.u32 %v38, 7
    %v40 = vadd.s32 %v39, 8
    %v41 = vlaneseq
    %v42 = vand.u32 %v41, 127
    %vm43 = vcmp.le.s32.totalorder %v39, %v42
    %vm44 = vcmp.le.s32.totalorder %v40, %v42
    %v45 = vsel %vm43, 1, 0
    %v46 = vsel %vm44, 1, 0
    %v47 = vcvt.s32.f32 %v45
    %v48 = vcvt.s32.f32 %v46
    %vm49 = vcmask 130048
    %v51 = vsel %vm49, %v37, 0
    %53 = vmatprep.subr.mxu0 0.0
    %54 = vmatpush1.msra.mxu0 %v47
    %55 = vmatprep.subr.mxu0 0.0
    %56 = vmatpush1.msra.mxu0 %v48
    %57 = vmatprep.subr.mxu0 0.0
    %58 = vmatpush1.msra.mxu0 0.0
    %59 = vmatprep.subr.mxu0 0.0
    %60 = vmatpush1.msra.mxu0 0.0
    %61 = vmatprep.subr.mxu0 0.0
    %62 = vmatpush1.msra.mxu0 0.0
    %63 = vmatprep.subr.mxu0 0.0
    %64 = vmatpush1.msra.mxu0 0.0
    %65 = vmatprep.subr.mxu0 0.0
    %66 = vmatpush1.msra.mxu0 0.0
    %67 = vmatprep.subr.mxu0 0.0
    %68 = vmatpush1.msra.mxu0 0.0
    %69 = vmatprep.subr.mxu0 0.0
    %70 = vmatpush1.msra.mxu0 0.0
    %71 = vmatprep.subr.mxu0 0.0
    %72 = vmatpush1.msra.mxu0 0.0
    %73 = vmatprep.subr.mxu0 0.0
    %74 = vmatpush1.msra.mxu0 0.0
    %75 = vmatprep.subr.mxu0 0.0
    %76 = vmatpush1.msra.mxu0 0.0
    %77 = vmatprep.subr.mxu0 0.0
    %78 = vmatpush1.msra.mxu0 0.0
    %79 = vmatprep.subr.mxu0 0.0
    %80 = vmatpush1.msra.mxu0 0.0
    %81 = vmatprep.subr.mxu0 0.0
    %82 = vmatpush1.msra.mxu0 0.0
    %83 = vmatprep.subr.mxu0 0.0
    %84 = vmatpush1.msra.mxu0 0.0
    %85 = vmatprep.subr.mxu0 0.0
    %86 = vmatpush1.msra.mxu0 0.0
    %87 = vmatprep.subr.mxu0 0.0
    %88 = vmatpush1.msra.mxu0 0.0
    %89 = vmatprep.subr.mxu0 0.0
    %90 = vmatpush1.msra.mxu0 0.0
    %91 = vmatprep.subr.mxu0 0.0
    %92 = vmatpush1.msra.mxu0 0.0
    %93 = vmatprep.subr.mxu0 0.0
    %94 = vmatpush1.msra.mxu0 0.0
    %95 = vmatprep.subr.mxu0 0.0
    %96 = vmatpush1.msra.mxu0 0.0
    %97 = vmatprep.subr.mxu0 0.0
    %98 = vmatpush1.msra.mxu0 0.0
    %99 = vmatprep.subr.mxu0 0.0
    %100 = vmatpush1.msra.mxu0 0.0
    %101 = vmatprep.subr.mxu0 0.0
    %102 = vmatpush1.msra.mxu0 0.0
    %103 = vmatprep.subr.mxu0 0.0
    %104 = vmatpush1.msra.mxu0 0.0
    %105 = vmatprep.subr.mxu0 0.0
    %106 = vmatpush1.msra.mxu0 0.0
    %107 = vmatprep.subr.mxu0 0.0
    %108 = vmatpush1.msra.mxu0 0.0
    %109 = vmatprep.subr.mxu0 0.0
    %110 = vmatpush1.msra.mxu0 0.0
    %111 = vmatprep.subr.mxu0 0.0
    %112 = vmatpush1.msra.mxu0 0.0
    %113 = vmatprep.subr.mxu0 0.0
    %114 = vmatpush1.msra.mxu0 0.0
    %115 = vmatprep.subr.mxu0 0.0
    %116 = vmatpush1.msra.mxu0 0.0
    %117 = vmatprep.mubr.f32.mxu0 0.0
    %118 = vmatmul.mubr.f32.gmra.mrb[0].mxu0 %v51
    %v119 = vpop.f32.mrb[0].mxu0
    %v120 = vadd.f32 0.0, %v119
    %v121 = vpop.f32.mrb[0].mxu0
    %122 = vdwg.mxu0
    %v123 = vmul.f32 %v120, %v120
    %v124 = vsel %vm49, %v123, 0.0
    %125 = vadd.xlane.f32.xlu0 %v124
    %v126 = vpop.xlane.xlu0 %125
    %v127 = vrcp.pop 16.0
    %v128 = vmul.f32 %v126, %v127
    %v129 = vrsqrt.pop %v128
    %v130 = vmul.f32 %v128, %v129
    %vm131 = vcmp.eq.f32.partialorder %v128, inf
    %v132 = vsel %vm131, %v128, %v130
    %vm133 = vcmp.eq.f32.partialorder %v128, 0.0
    %v134 = vand.u32 %v128, 2147483648
    %v135 = vsel %vm133, %v134, %v132
    %vm136 = vcmask 7168
    %137 = vst.msk [vmem:[%s2] sm:$0xff] %vm136, %v135
    // Predicated region
    $region18: #{tpu_custom_call.1} parent=1 // pred_check
      _
    $region19: #{tpu_custom_call.1} parent=1 // pred_check_branch
      %139 = sbr.rel (0) target = $region21
    $region20: #{tpu_custom_call.1} parent=1 // pred_region
      _
    $region21: #{tpu_custom_call.1} parent=1 // pred_fallthru
      _
    // Predicated region
    $region22: #{tpu_custom_call.1} parent=1 // pred_check
      _
    $region23: #{tpu_custom_call.1} parent=1 // pred_check_branch
      %141 = sbr.rel (0) target = $region25
    $region24: #{tpu_custom_call.1} parent=1 // pred_region
      _
    $region25: #{tpu_custom_call.1} parent=1 // pred_fallthru
      _
    %142 = vsyncpa [#allocation3], 1
    %143 = vsyncpa [#allocation5], 1

</llo_original>
